<compile_context>
chip_gen: v6e
topology: v6e:2x2x1
jax: 0.10.0
libtpu: 0.0.40
codegen_flags: <defaults>
</compile_context>

<pallas_src>
import functools

import jax
import jax.numpy as jnp
from jax.experimental import pallas as pl
from jax.experimental.pallas import tpu as pltpu


def _round_up(x, m):
    return (x + m - 1) // m * m


# ----------------------------------------------------------------------------
# Hardware-aware VMEM budgets (cached; conservative fallback if query fails).
# ----------------------------------------------------------------------------
@functools.lru_cache(maxsize=None)
def _vmem_budgets():
    cap = 64 * 1024 * 1024  # conservative default = v7x per-TC VMEM
    try:
        info = pltpu.get_tpu_info()
        cap = int(getattr(info, "vmem_capacity_bytes", cap) or cap)
    except Exception:
        pass
    # Scoped limit handed to Mosaic: raise it above the 16/32 MiB defaults so
    # bigger tiles are legal (v5e/v6e -> 64 MiB, v7x -> ~48 MiB), but never at
    # the physical ceiling.
    vmem_limit = max(32 * 1024 * 1024, min(cap * 3 // 4, 64 * 1024 * 1024))
    # Budget for the double-buffered tile working set, with headroom for the
    # compiler's own scratch (v7x -> ~25 MiB, v5e/v6e -> ~40 MiB).
    tile_budget = min(cap * 2 // 5, 40 * 1024 * 1024)
    return int(vmem_limit), int(tile_budget)


# ----------------------------------------------------------------------------
# Pallas kernel: tiled Linear (y = x @ W + b) with resident f32 accumulator.
# ----------------------------------------------------------------------------
def _linear_kernel(x_ref, w_ref, b_ref, o_ref, acc_ref):
    k = pl.program_id(2)

    @pl.when(k == 0)
    def _():
        acc_ref[...] = jnp.zeros_like(acc_ref)

    acc_ref[...] += jnp.dot(x_ref[...], w_ref[...],
                            preferred_element_type=jnp.float32)

    @pl.when(k == pl.num_programs(2) - 1)
    def _():
        # Bias added once at finalize; f32 epilogue, cast only at the store.
        o_ref[...] = (acc_ref[...] + b_ref[...].astype(jnp.float32)
                      ).astype(o_ref.dtype)


# ----------------------------------------------------------------------------
# Tile selection under a VMEM working-set budget.
# ----------------------------------------------------------------------------
def _tile_footprint(tm, tn, tk, in_isz, out_isz):
    # Double-buffered x / w / bias / out tiles + resident f32 accumulator.
    return (2 * (tm * tk * in_isz + tk * tn * in_isz + tn * in_isz
                 + tm * tn * out_isz)
            + tm * tn * 4)


def _pick_tiles(M, N_pad, K_pad, in_isz, out_isz, tile_budget):
    # tn: largest lane-dense multiple of 128 dividing N_pad (<= 512).
    tn_cands = [t for t in (512, 384, 256, 128) if N_pad % t == 0] or [128]
    # tk: largest multiple of 128 dividing K_pad (<= 1024) — fewer, fatter K
    # steps mean fewer f32 accumulator read-modify-writes and pipeline bubbles.
    tk_cands = [t for t in range(min(K_pad, 1024), 127, -128)
                if K_pad % t == 0] or [128]
    # tm: minimize ragged-M padding waste, tie-break toward the larger tile
    # (less weight re-streaming from HBM).
    tm_cands = sorted((512, 256, 128, 64),
                      key=lambda t: (_round_up(M, t) - M, -t))

    for tm in tm_cands:
        for tn in tn_cands:
            for tk in tk_cands:
                if _tile_footprint(tm, tn, tk, in_isz, out_isz) <= tile_budget:
                    return tm, tn, tk
    return 64, 128, 128  # minimal lane-dense fallback


# ----------------------------------------------------------------------------
# Linear wrapper around pallas_call.
# ----------------------------------------------------------------------------
def pallas_linear(x2d, w, b, *, use_bf16_matmul=False):
    """y = x2d @ w + b.  w: (K, N), b: (1, N).

    The caller (TracedLinearModule) pre-pads w/b to lane-aligned shapes once at
    init; residual ragged padding (and M padding of x) is handled here only
    when actually needed.
    """
    M, K = x2d.shape
    Kw, N = w.shape
    assert K == Kw and b.shape == (1, N)
    out_dtype = x2d.dtype

    # Fast-path bailout: tiny / lane-sparse problems are pure pallas_call +
    # DMA + pad/slice overhead — let XLA fuse dot + bias instead.
    if N < 128 or K < 128 or M < 64 or 2 * M * N * K < (8 << 20):
        y = jnp.dot(x2d, w, preferred_element_type=jnp.float32) + b
        return y.astype(out_dtype)

    N_pad = _round_up(N, 128)
    K_pad = _round_up(K, 128)

    in_dtype = jnp.bfloat16 if use_bf16_matmul else x2d.dtype
    in_isz = jnp.dtype(in_dtype).itemsize
    out_isz = jnp.dtype(out_dtype).itemsize

    vmem_limit, tile_budget = _vmem_budgets()
    tm, tn, tk = _pick_tiles(M, N_pad, K_pad, in_isz, out_isz, tile_budget)
    M_pad = _round_up(M, tm)

    # Guarantee >= 2 parallel blocks on the (M, N) grid so both TensorCores get
    # work on v7x; on single-TC v5e/v6e this costs at most one extra tiny step.
    if (M_pad // tm) * (N_pad // tn) == 1:
        if tn >= 256:
            tn //= 2
        elif tm >= 16:
            tm //= 2
            M_pad = _round_up(M, tm)

    # Pad only when needed (steady state: w/b already aligned, x unpadded).
    x_p = x2d
    if (M_pad, K_pad) != (M, K):
        x_p = jnp.pad(x2d, ((0, M_pad - M), (0, K_pad - K)))
    w_p = w if (K_pad, N_pad) == (K, N) else jnp.pad(
        w, ((0, K_pad - K), (0, N_pad - N)))
    b_p = b if N_pad == N else jnp.pad(b, ((0, 0), (0, N_pad - N)))

    if use_bf16_matmul and x_p.dtype != jnp.bfloat16:
        # Opt-in bf16 MXU path; accumulator and bias epilogue stay f32.
        x_p = x_p.astype(jnp.bfloat16)
        w_p = w_p.astype(jnp.bfloat16)

    grid = (M_pad // tm, N_pad // tn, K_pad // tk)
    grid_m, grid_n, _ = grid

    # Advisory cost estimate; bytes_accessed reflects tile re-streaming:
    # x is read grid_n times, w (and bias) grid_m times, output written once.
    bytes_accessed = (x_p.size * x_p.dtype.itemsize * grid_n
                      + w_p.size * w_p.dtype.itemsize * grid_m
                      + b_p.size * b_p.dtype.itemsize * grid_m
                      + M_pad * N_pad * out_isz)

    # TODO(synk): for decode-like small-M shapes on v7x, sweep
    # pipeline_mode=pl.Buffered(3) on the weight BlockSpec before committing.
    out = pl.pallas_call(
        _linear_kernel,
        out_shape=jax.ShapeDtypeStruct((M_pad, N_pad), out_dtype),
        grid_spec=pltpu.PrefetchScalarGridSpec(
            num_scalar_prefetch=0,
            grid=grid,
            in_specs=[
                pl.BlockSpec((tm, tk), lambda i, j, k: (i, k)),
                pl.BlockSpec((tk, tn), lambda i, j, k: (k, j)),
                pl.BlockSpec((1, tn), lambda i, j, k: (0, j)),
            ],
            out_specs=pl.BlockSpec((tm, tn), lambda i, j, k: (i, j)),
            scratch_shapes=[pltpu.VMEM((tm, tn), jnp.float32)],
        ),
        compiler_params=pltpu.CompilerParams(
            dimension_semantics=("parallel", "parallel", "arbitrary"),
            vmem_limit_bytes=int(vmem_limit)),
        cost_estimate=pl.CostEstimate(
            flops=2 * M_pad * N_pad * K_pad,
            transcendentals=0,
            bytes_accessed=int(bytes_accessed)),
    )(x_p, w_p, b_p)

    if (M_pad, N_pad) != (M, N):
        out = out[:M, :N]
    return out


# ----------------------------------------------------------------------------
# The wrapped "traced" module: a Linear layer taking positional flat tensors.
# ----------------------------------------------------------------------------
class TracedLinearModule:
    """Stand-in for the traced inner module. Accepts flat tensors positionally.

    Weight/bias are pre-padded ONCE at construction to lane-aligned
    (multiple-of-128) shapes so the steady-state forward never pays a per-call
    HBM copy of the weight matrix just to pad it.
    """

    def __init__(self, hidden, dtype=jnp.float32, use_bf16_matmul=False):
        key = jax.random.PRNGKey(42)
        kw, kb = jax.random.split(key)
        w = (jax.random.normal(kw, (hidden, hidden), dtype)
             * (1.0 / jnp.sqrt(hidden))).astype(dtype)
        bvec = (jax.random.normal(kb, (1, hidden), dtype) * 0.01).astype(dtype)

        self.hidden = hidden
        self.hidden_pad = _round_up(hidden, 128)
        pad = self.hidden_pad - hidden
        self.weight = w
        self.bias = bvec
        self.weight_pad = jnp.pad(w, ((0, pad), (0, pad))) if pad else w
        self.bias_pad = jnp.pad(bvec, ((0, 0), (0, pad))) if pad else bvec
        self.use_bf16_matmul = use_bf16_matmul
        self.training = False

    def __call__(self, *flat_tensors):
        (x,) = flat_tensors
        lead = x.shape[:-1]
        hidden = x.shape[-1]
        assert hidden == self.hidden
        x2d = x.reshape(-1, hidden)
        if self.hidden_pad != hidden:
            # x padding is tiny compared to the (avoided) weight copy.
            x2d = jnp.pad(x2d, ((0, 0), (0, self.hidden_pad - hidden)))
        y2d = pallas_linear(x2d, self.weight_pad, self.bias_pad,
                            use_bf16_matmul=self.use_bf16_matmul)
        if self.hidden_pad != hidden:
            y2d = y2d[:, :hidden]
        y = y2d.reshape(*lead, hidden)
        return (y,)  # traced modules return a flat tuple of tensors


# ----------------------------------------------------------------------------
# convert_to_flat_tensors / convert_from_flat_tensors equivalents via pytrees.
# ----------------------------------------------------------------------------
def convert_to_flat_tensors(pytree):
    leaves, treedef = jax.tree_util.tree_flatten(pytree)
    return leaves, treedef


def convert_from_flat_tensors(flat_outputs):
    # TODO(synk): sfast serializes non-tensor leaves / output treedefs into byte
    # tensors; that metadata round-trip has no tensor-compute equivalent.
    if isinstance(flat_outputs, (tuple, list)) and len(flat_outputs) == 1:
        return flat_outputs[0]
    return flat_outputs


class TracedPosArgOnlyModuleWrapper:
    """JAX equivalent of sfast.jit.trace_helper.TracedPosArgOnlyModuleWrapper."""

    def __init__(self, module, *, training=None):
        self.module = module
        if training is None:
            training = getattr(module, "training", False)
        self.training = training
        if hasattr(module, "training"):
            module.training = training

    def __call__(self, *args, **kwargs):
        flat_tensors, _ = convert_to_flat_tensors((args, kwargs))
        outputs = self.module(*flat_tensors)
        return convert_from_flat_tensors(outputs)


# ----------------------------------------------------------------------------
# Driver
# ----------------------------------------------------------------------------
if __name__ == "__main__":
    # batch*seq = 128 rows, hidden = 256: small, but above the fast-path
    # bailout (M >= 64, lane-dense N/K, > 8 MFLOP) so the Pallas path runs.
    batch, seq, hidden = 2, 64, 256
    key = jax.random.PRNGKey(0)
    x = jax.random.normal(key, (batch, seq, hidden), jnp.float32)

    inner = TracedLinearModule(hidden)
    wrapper = TracedPosArgOnlyModuleWrapper(inner, training=False)

    y = wrapper(x)
    y = jax.block_until_ready(y)

    # Reference check (plain JAX, default MXU precision — same regime as the
    # kernel's jnp.dot; tolerance chosen deliberately for MXU f32 matmul).
    y_ref = (jnp.dot(x.reshape(-1, hidden), inner.weight)
             + inner.bias).reshape(batch, seq, hidden)
    assert y.shape == (batch, seq, hidden)
    assert jnp.allclose(y, y_ref, atol=2e-2, rtol=2e-2), \
        float(jnp.max(jnp.abs(y - y_ref)))

    print("KERNEL_OK")
</pallas_src>

<mosaic_0001>
module attributes {stable_mosaic.version = 11 : i64} {
  func.func @_linear_kernel(%arg0: i32, %arg1: i32, %arg2: i32, %arg3: memref<128x256xf32, #tpu.memory_space<vmem>>, %arg4: memref<256x128xf32, #tpu.memory_space<vmem>>, %arg5: memref<1x128xf32, #tpu.memory_space<vmem>>, %arg6: memref<128x128xf32, #tpu.memory_space<vmem>>, %arg7: memref<128x128xf32, #tpu.memory_space<vmem>>) attributes {dimension_semantics = [#tpu.dimension_semantics<parallel>, #tpu.dimension_semantics<parallel>, #tpu.dimension_semantics<arbitrary>], iteration_bounds = array<i64: 1, 2, 1>, scalar_prefetch = 0 : i64, scratch_operands = 1 : i64, tpu.core_type = #tpu.core_type<tc>, window_params = [{transform_indices = @transform_0, window_bounds = array<i64: 128, 256>}, {transform_indices = @transform_1, window_bounds = array<i64: 256, 128>}, {transform_indices = @transform_2, window_bounds = array<i64: 1, 128>}, {transform_indices = @transform_3, window_bounds = array<i64: 128, 128>}]} {
    %c0_i32 = arith.constant 0 : i32
    %0 = arith.cmpi eq, %arg2, %c0_i32 : i32
    %1 = arith.extui %0 : i1 to i32
    %c0_i32_0 = arith.constant 0 : i32
    %2 = arith.cmpi ne, %1, %c0_i32_0 : i32
    scf.if %2 {
      %cst_10 = arith.constant 0.000000e+00 : f32
      %12 = vector.broadcast %cst_10 : f32 to vector<128x128xf32>
      %c0_11 = arith.constant 0 : index
      %c0_12 = arith.constant 0 : index
      %13 = vector.load %arg7[%c0_11, %c0_12] : memref<128x128xf32, #tpu.memory_space<vmem>>, vector<128x128xf32>
      tpu.vector_store %arg7[%c0_11, %c0_12], %12 {strides = array<i32>} : memref<128x128xf32, #tpu.memory_space<vmem>>, vector<128x128xf32>,
    } else {
    }
    %c0 = arith.constant 0 : index
    %c0_1 = arith.constant 0 : index
    %3 = vector.load %arg7[%c0, %c0_1] : memref<128x128xf32, #tpu.memory_space<vmem>>, vector<128x128xf32>
    %c0_2 = arith.constant 0 : index
    %c0_3 = arith.constant 0 : index
    %4 = vector.load %arg3[%c0_2, %c0_3] : memref<128x256xf32, #tpu.memory_space<vmem>>, vector<128x256xf32>
    %c0_4 = arith.constant 0 : index
    %c0_5 = arith.constant 0 : index
    %5 = vector.load %arg4[%c0_4, %c0_5] : memref<256x128xf32, #tpu.memory_space<vmem>>, vector<256x128xf32>
    %cst = arith.constant dense<0.000000e+00> : vector<128x128xf32>
    %6 = tpu.matmul %4, %5, %cst {dimension_numbers = #tpu.dot_dimension_numbers<[1], [0], [0], [1], [0, 0, 1, 1], [], []>} : vector<128x256xf32>, vector<256x128xf32>, vector<128x128xf32> -> vector<128x128xf32>
    %7 = arith.addf %3, %6 : vector<128x128xf32>
    %c0_6 = arith.constant 0 : index
    %c0_7 = arith.constant 0 : index
    %8 = vector.load %arg7[%c0_6, %c0_7] : memref<128x128xf32, #tpu.memory_space<vmem>>, vector<128x128xf32>
    tpu.vector_store %arg7[%c0_6, %c0_7], %7 {strides = array<i32>} : memref<128x128xf32, #tpu.memory_space<vmem>>, vector<128x128xf32>,
    %c0_i32_8 = arith.constant 0 : i32
    %9 = arith.cmpi eq, %arg2, %c0_i32_8 : i32
    %10 = arith.extui %9 : i1 to i32
    %c0_i32_9 = arith.constant 0 : i32
    %11 = arith.cmpi ne, %10, %c0_i32_9 : i32
    scf.if %11 {
      %c0_10 = arith.constant 0 : index
      %c0_11 = arith.constant 0 : index
      %12 = vector.load %arg7[%c0_10, %c0_11] : memref<128x128xf32, #tpu.memory_space<vmem>>, vector<128x128xf32>
      %c0_12 = arith.constant 0 : index
      %c0_13 = arith.constant 0 : index
      %13 = vector.load %arg5[%c0_12, %c0_13] : memref<1x128xf32, #tpu.memory_space<vmem>>, vector<1x128xf32>
      %14 = vector.broadcast %13 : vector<1x128xf32> to vector<128x128xf32>
      %15 = arith.addf %12, %14 : vector<128x128xf32>
      %c0_14 = arith.constant 0 : index
      %c0_15 = arith.constant 0 : index
      %16 = vector.load %arg6[%c0_14, %c0_15] : memref<128x128xf32, #tpu.memory_space<vmem>>, vector<128x128xf32>
      tpu.vector_store %arg6[%c0_14, %c0_15], %15 {strides = array<i32>} : memref<128x128xf32, #tpu.memory_space<vmem>>, vector<128x128xf32>,
    } else {
    }
    return
  }
  func.func @transform_0(%arg0: i32, %arg1: i32, %arg2: i32) -> (i32, i32) {
    %c0_i32 = arith.constant 0 : i32
    return %arg0, %arg2 : i32, i32
  }
  func.func @transform_1(%arg0: i32, %arg1: i32, %arg2: i32) -> (i32, i32) {
    %c0_i32 = arith.constant 0 : i32
    return %arg2, %arg1 : i32, i32
  }
  func.func @transform_2(%arg0: i32, %arg1: i32, %arg2: i32) -> (i32, i32) {
    %c0_i32 = arith.constant 0 : i32
    %c0_i32_0 = arith.constant 0 : i32
    return %c0_i32, %arg1 : i32, i32
  }
  func.func @transform_3(%arg0: i32, %arg1: i32, %arg2: i32) -> (i32, i32) {
    %c0_i32 = arith.constant 0 : i32
    return %arg0, %arg1 : i32, i32
  }
}

</mosaic_0001>

<llo_original>
// kernel: tpu_custom_call.1
$region0: #{tpu_custom_call.1}
  #allocation0 [shape = 'u32[]', space=smem, size = 0x4, offset = 0x4, fixed_abs, tag = 'smem constant byte address 0x4 - core index']
  #allocation1 [shape = 'u32[144,128]{1,0:T(1,128)}', space=vmem, size = 0x12000, scoped, tag = 'internal scratch']
  #allocation2 [shape = 'f32[128,128]{1,0:T(8,128)}', space=vmem, size = 0x10000, scoped, tag = 'scratch operand']
  %s0 = inlined_call_operand.hbm [shape: f32[128,256], index: 0, kind: input, shape index: {}]
  %s1 = inlined_call_operand.hbm [shape: f32[256,256], index: 1, kind: input, shape index: {}]
  %s2 = inlined_call_operand.vmem [shape: f32[1,256], index: 2, kind: input, shape index: {}]
  %s3 = inlined_call_operand.hbm [shape: f32[128,256], index: 3, kind: output, shape index: {}]
  %s4 = sld [smem:[#allocation0]]
  $region61: #{tpu_custom_call.1} parent=0
    _
  %s6 = ssub.s32 1, %s4
  %s7 = scalar_select 0, %s6, %s4
  $region1: #{tpu_custom_call.1} parent=0
    #allocation3 [shape = 'u8[131072]{0}', space=vmem, size = 0x20000, scoped, tag = 'input window, operand 0, single buffered']
    #allocation4 [shape = 's32[2]{0}', space=sflag, size = 0x8, scoped, tag = 'scoped memory for tpu_custom_call.1']
    #allocation5 [shape = 's32[2]{0}', space=sflag, size = 0x8, scoped, tag = 'scoped memory for tpu_custom_call.1']
    #allocation6 [shape = 'u8[262144]{0}', space=vmem, size = 0x40000, scoped, tag = 'input window, operand 1']
    #allocation7 [shape = 's32[2]{0}', space=sflag, size = 0x8, scoped, tag = 'scoped memory for tpu_custom_call.1']
    #allocation8 [shape = 'u8[131072]{0}', space=vmem, size = 0x20000, scoped, tag = 'output window, operand 0']
    %8 = vsyncpa [#allocation4], 0
    %9 = vsyncpa [#allocation7], 0
    %s10 = scalar_lea.sflag [#allocation7], 1
    %11 = vsyncpa %s10, 0
    %12 = vsyncpa [#allocation5], 0
    %s13 = scalar_lea.sflag [#allocation5], 1
    %14 = vsyncpa %s13, 0
    loop: start=0, step=1, limit=4
    $region2: #{tpu_custom_call.1} parent=1 // loop_pre_header
      _
    $region3: #{tpu_custom_call.1} parent=1 // loop_header
      %s16 = sphi 0, %s20
      %p17 = scmp.ge.s32.totalorder %s16, 4
      %s23 = sphi 0, %s42
      %s24 = sphi 0, %s38
      %s25 = sphi 0, %s34
      %s26 = sphi 0, %s23
      %s27 = sphi 0, %s24
      %s28 = sphi 0, %s25
      %s29 = sphi 0, %s26
      %s30 = sphi 0, %s27
      %s31 = sphi 0, %s28
      %s47 = sphi 0, %s49
      %s50 = sphi 0, %s47
      %s51 = sphi 0, %s50
      %s67 = sphi 0, %s51
      %s75 = sphi 0, %s77
      %s78 = sphi 0, %s75
      %s79 = sphi 0, %s78
      %s95 = sphi 0, %s79
      %s101 = sphi 0, %s103
      %s104 = sphi 0, %s101
      %s105 = sphi 0, %s104
      %s121 = sphi 0, %s105
      %s129 = sphi 0, %s131
      %s132 = sphi 0, %s129
      %s133 = sphi 0, %s132
      %s149 = sphi 0, %s133
    $region4: #{tpu_custom_call.1} parent=1 // loop_header_branch
      %19 = sbr.rel (%p17) target = $region8
    $region5: #{tpu_custom_call.1} parent=1 // loop_body
      %s21 = ssub.s32 %s16, 1
      %s22 = ssub.s32 %s16, 2
      %s32 = sadd.s32 1, %s25
      %p33 = scmp.ge.s32.totalorder %s32, 1
      %s34 = scalar_select %p33, 0, %s32
      %s35 = sadd.s32 1, %s24
      %s36 = scalar_select %p33, %s35, %s24
      %p37 = scmp.ge.s32.totalorder %s36, 2
      %s38 = scalar_select %p37, 0, %s36
      %s39 = sadd.s32 1, %s23
      %s40 = scalar_select %p37, %s39, %s23
      %p41 = scmp.ge.s32.totalorder %s40, 1
      %s42 = scalar_select %p41, 0, %s40
      %s43 = ssub.s32 %s23, %s42
      %s44 = ssub.s32 %s25, %s34
      %s45 = sor.u32 %s43, %s44
      %p46 = scmp.eq.s32.totalorder %s45, 0
      %s48 = sadd.s32 %s47, 1
      %s49 = scalar_select %p46, %s47, %s48
      %p52 = pneg %p46
      %p53 = scmp.eq.s32.totalorder %s16, 1
      %p54 = por %p52, %p53
      %p55 = scmp.ne.s32.totalorder %s47, %s50
      %p56 = scmp.eq.s32.totalorder %s16, 0
      %p57 = por %p55, %p56
      %p58 = scmp.ne.s32.totalorder %s47, %s50
      %p59 = scmp.eq.s32.totalorder %s21, 1
      %p60 = por %p58, %p59
      %p61 = scmp.ne.s32.totalorder %s50, %s51
      %p62 = scmp.eq.s32.totalorder %s21, 0
      %p63 = por %p61, %p62
      %p64 = scmp.ne.s32.totalorder %s50, %s51
      %p65 = scmp.eq.s32.totalorder %s22, 1
      %p66 = por %p64, %p65
      %p68 = scmp.ne.s32.totalorder %s51, %s67
      %p69 = scmp.eq.s32.totalorder %s22, 0
      %p70 = por %p68, %p69
      %s71 = ssub.s32 %s25, %s34
      %s72 = ssub.s32 %s24, %s38
      %s73 = sor.u32 %s71, %s72
      %p74 = scmp.eq.s32.totalorder %s73, 0
      %s76 = sadd.s32 %s75, 1
      %s77 = scalar_select %p74, %s75, %s76
      %p80 = pneg %p74
      %p81 = scmp.eq.s32.totalorder %s16, 1
      %p82 = por %p80, %p81
      %p83 = scmp.ne.s32.totalorder %s75, %s78
      %p84 = scmp.eq.s32.totalorder %s16, 0
      %p85 = por %p83, %p84
      %p86 = scmp.ne.s32.totalorder %s75, %s78
      %p87 = scmp.eq.s32.totalorder %s21, 1
      %p88 = por %p86, %p87
      %p89 = scmp.ne.s32.totalorder %s78, %s79
      %p90 = scmp.eq.s32.totalorder %s21, 0
      %p91 = por %p89, %p90
      %p92 = scmp.ne.s32.totalorder %s78, %s79
      %p93 = scmp.eq.s32.totalorder %s22, 1
      %p94 = por %p92, %p93
      %p96 = scmp.ne.s32.totalorder %s79, %s95
      %p97 = scmp.eq.s32.totalorder %s22, 0
      %p98 = por %p96, %p97
      %s99 = ssub.s32 %s24, %s38
      %p100 = scmp.eq.s32.totalorder %s99, 0
      %s102 = sadd.s32 %s101, 1
      %s103 = scalar_select %p100, %s101, %s102
      %p106 = pneg %p100
      %p107 = scmp.eq.s32.totalorder %s16, 1
      %p108 = por %p106, %p107
      %p109 = scmp.ne.s32.totalorder %s101, %s104
      %p110 = scmp.eq.s32.totalorder %s16, 0
      %p111 = por %p109, %p110
      %p112 = scmp.ne.s32.totalorder %s101, %s104
      %p113 = scmp.eq.s32.totalorder %s21, 1
      %p114 = por %p112, %p113
      %p115 = scmp.ne.s32.totalorder %s104, %s105
      %p116 = scmp.eq.s32.totalorder %s21, 0
      %p117 = por %p115, %p116
      %p118 = scmp.ne.s32.totalorder %s104, %s105
      %p119 = scmp.eq.s32.totalorder %s22, 1
      %p120 = por %p118, %p119
      %p122 = scmp.ne.s32.totalorder %s105, %s121
      %p123 = scmp.eq.s32.totalorder %s22, 0
      %p124 = por %p122, %p123
      %s125 = ssub.s32 %s23, %s42
      %s126 = ssub.s32 %s24, %s38
      %s127 = sor.u32 %s125, %s126
      %p128 = scmp.eq.s32.totalorder %s127, 0
      %s130 = sadd.s32 %s129, 1
      %s131 = scalar_select %p128, %s129, %s130
      %p134 = pneg %p128
      %p135 = scmp.eq.s32.totalorder %s16, 1
      %p136 = por %p134, %p135
      %p137 = scmp.ne.s32.totalorder %s129, %s132
      %p138 = scmp.eq.s32.totalorder %s16, 0
      %p139 = por %p137, %p138
      %p140 = scmp.ne.s32.totalorder %s129, %s132
      %p141 = scmp.eq.s32.totalorder %s21, 1
      %p142 = por %p140, %p141
      %p143 = scmp.ne.s32.totalorder %s132, %s133
      %p144 = scmp.eq.s32.totalorder %s21, 0
      %p145 = por %p143, %p144
      %p146 = scmp.ne.s32.totalorder %s132, %s133
      %p147 = scmp.eq.s32.totalorder %s22, 1
      %p148 = por %p146, %p147
      %p150 = scmp.ne.s32.totalorder %s133, %s149
      %p151 = scmp.eq.s32.totalorder %s22, 0
      %p152 = por %p150, %p151
      %p153 = scmp.le.s32.totalorder 1, %s16
      %p154 = scmp.lt.s32.totalorder %s16, 3
      %p155 = pnand %p153, %p154
      %p156 = pneg %p155
      // Predicated region
      $region9: #{tpu_custom_call.1} parent=5 // pred_check
        _
      $region10: #{tpu_custom_call.1} parent=5 // pred_check_branch
        %158 = sbr.rel (%p155) target = $region12
      $region11: #{tpu_custom_call.1} parent=5 // pred_region
        %s159 = ssub.s32 %s16, 1
        // Predicated region
        $region13: #{tpu_custom_call.1} parent=11 // pred_check
          %p160 = pneg %p63
        $region14: #{tpu_custom_call.1} parent=11 // pred_check_branch
          %162 = sbr.rel (%p160) target = $region16
        $region15: #{tpu_custom_call.1} parent=11 // pred_region
          %s163 = smul.u32 16, %s26
          %s164 = smul.u32 2, %s28
          %s166 = ssub.s32 4096, 4096
          %167 = vsyncadd [#allocation4], %s166
          %s168 = smul.addr %s163, 2
          %s169 = sadd.s32 %s164, %s168
          %s170 = smul.addr %s169, 128
          %s171 = scalar_lea.hbm %s0, %s170
          %s172 = sshll.u32 [#allocation3], 4
          %s173 = int_to_ptr.vmem [resolvable:$true] %s172
          %178 = dma.hbm_to_vmem [thread:$0]  %s171, 4096, %s173, [#allocation4], 256, 256, 16
        $region16: #{tpu_custom_call.1} parent=11 // pred_fallthru
          _
      $region12: #{tpu_custom_call.1} parent=5 // pred_fallthru
        _
      %p179 = scmp.lt.s32.totalorder %s16, 2
      // Predicated region
      $region17: #{tpu_custom_call.1} parent=5 // pred_check
        %p180 = pneg %p179
      $region18: #{tpu_custom_call.1} parent=5 // pred_check_branch
        %182 = sbr.rel (%p180) target = $region20
      $region19: #{tpu_custom_call.1} parent=5 // pred_region
        // Predicated region
        $region21: #{tpu_custom_call.1} parent=19 // pred_check
          %p183 = pneg %p85
        $region22: #{tpu_custom_call.1} parent=19 // pred_check_branch
          %185 = sbr.rel (%p183) target = $region24
        $region23: #{tpu_custom_call.1} parent=19 // pred_region
          %s186 = sand.u32 %s75, 1
          %s187 = scalar_lea.sflag [#allocation7], %s186
          %s188 = sand.u32 %s75, 1
          %s189 = smul.addr %s188, 256
          %s190 = scalar_lea.vmem [#allocation6], %s189
          %s191 = smul.u32 32, %s25
          %s193 = ssub.s32 4096, 4096
          %194 = vsyncadd %s187, %s193
          %s195 = smul.addr %s191, 2
          %s196 = sadd.s32 %s24, %s195
          %s197 = smul.addr %s196, 128
          %s198 = scalar_lea.hbm %s1, %s197
          %s199 = sshll.u32 %s190, 4
          %s200 = int_to_ptr.vmem [resolvable:$true] %s199
          %205 = dma.hbm_to_vmem [thread:$0]  %s198, 4096, %s200, %s187, 256, 128, 8
        $region24: #{tpu_custom_call.1} parent=19 // pred_fallthru
          _
        // Predicated region
        $region25: #{tpu_custom_call.1} parent=19 // pred_check
          %p206 = pneg %p111
        $region26: #{tpu_custom_call.1} parent=19 // pred_check_branch
          %208 = sbr.rel (%p206) target = $region28
        $region27: #{tpu_custom_call.1} parent=19 // pred_region
          %p209 = scmp.lt.s32.totalorder %s24, 1
          %s210 = scalar_select %p209, %s24, 1
          %s211 = scalar_lea.vmem %s2, %s210
        $region28: #{tpu_custom_call.1} parent=19 // pred_fallthru
          _
      $region20: #{tpu_custom_call.1} parent=5 // pred_fallthru
        _
      %p212 = scmp.le.s32.totalorder 1, %s16
      %p213 = scmp.lt.s32.totalorder %s16, 3
      %p214 = pnand %p212, %p213
      %p215 = pneg %p214
      // Predicated region
      $region29: #{tpu_custom_call.1} parent=5 // pred_check
        _
      $region30: #{tpu_custom_call.1} parent=5 // pred_check_branch
        %217 = sbr.rel (%p214) target = $region32
      $region31: #{tpu_custom_call.1} parent=5 // pred_region
        %s218 = ssub.s32 %s16, 1
        // Predicated region
        $region33: #{tpu_custom_call.1} parent=31 // pred_check
          %p219 = pneg %p63
        $region34: #{tpu_custom_call.1} parent=31 // pred_check_branch
          %221 = sbr.rel (%p219) target = $region36
        $region35: #{tpu_custom_call.1} parent=31 // pred_region
          %222 = dma.done [#allocation4], 4096
        $region36: #{tpu_custom_call.1} parent=31 // pred_fallthru
          _
        %s223 = sand.u32 %s78, 1
        %s224 = scalar_lea.sflag [#allocation7], %s223
        %s225 = sand.u32 %s78, 1
        %s226 = smul.addr %s225, 256
        %s227 = scalar_lea.vmem [#allocation6], %s226
        // Predicated region
        $region37: #{tpu_custom_call.1} parent=31 // pred_check
          %p228 = pneg %p91
        $region38: #{tpu_custom_call.1} parent=31 // pred_check_branch
          %230 = sbr.rel (%p228) target = $region40
        $region39: #{tpu_custom_call.1} parent=31 // pred_region
          %231 = dma.done %s224, 4096
        $region40: #{tpu_custom_call.1} parent=31 // pred_fallthru
          _
        %p232 = pneg %p63
        %p233 = pneg %p60
        %s234 = sand.u32 %s78, 1
        %s235 = scalar_lea.sflag [#allocation7], %s234
        %s236 = sand.u32 %s78, 1
        %s237 = smul.addr %s236, 256
        %s238 = scalar_lea.vmem [#allocation6], %s237
        %p239 = pneg %p91
        %p240 = pneg %p88
        %p241 = scmp.lt.s32.totalorder %s27, 1
        %s242 = scalar_select %p241, %s27, 1
        %s243 = scalar_lea.vmem %s2, %s242
        %p244 = pneg %p117
        %p245 = pneg %p114
        %p246 = pneg %p145
        %p247 = pneg %p142
        %s248 = sand.u32 %s132, 1
        %s249 = scalar_lea.sflag [#allocation5], %s248
        %s250 = sand.u32 %s132, 1
        %s251 = smul.addr %s250, 128
        %s252 = scalar_lea.vmem [#allocation8], %s251
        %s253 = smul.u32 16, %s26
        %s254 = smul.u32 2, %s28
        %s255 = smul.u32 32, %s28
        %p256 = scmp.lt.s32.totalorder %s27, 1
        %s257 = scalar_select %p256, %s27, 1
        %s258 = scalar_lea.vmem %s2, %s257
        %s259 = smul.u32 16, %s26
        %p260 = scmp.eq.s32.totalorder %s28, 0
        // Predicated region
        $region41: #{tpu_custom_call.1} parent=31 // pred_check
          %p261 = pneg %p260
        $region42: #{tpu_custom_call.1} parent=31 // pred_check_branch
          %263 = sbr.rel (%p261) target = $region44
        $region43: #{tpu_custom_call.1} parent=31 // pred_region
          %264 = vst [vmem:[#allocation2] sm:$0xff] 0.0
          %265 = vst [vmem:[#allocation2 + $0x8] sm:$0xff] 0.0
          %266 = vst [vmem:[#allocation2 + $0x10] sm:$0xff] 0.0
          %267 = vst [vmem:[#allocation2 + $0x18] sm:$0xff] 0.0
          %268 = vst [vmem:[#allocation2 + $0x20] sm:$0xff] 0.0
          %269 = vst [vmem:[#allocation2 + $0x28] sm:$0xff] 0.0
          %270 = vst [vmem:[#allocation2 + $0x30] sm:$0xff] 0.0
          %271 = vst [vmem:[#allocation2 + $0x38] sm:$0xff] 0.0
          %272 = vst [vmem:[#allocation2 + $0x40] sm:$0xff] 0.0
          %273 = vst [vmem:[#allocation2 + $0x48] sm:$0xff] 0.0
          %274 = vst [vmem:[#allocation2 + $0x50] sm:$0xff] 0.0
          %275 = vst [vmem:[#allocation2 + $0x58] sm:$0xff] 0.0
          %276 = vst [vmem:[#allocation2 + $0x60] sm:$0xff] 0.0
          %277 = vst [vmem:[#allocation2 + $0x68] sm:$0xff] 0.0
          %278 = vst [vmem:[#allocation2 + $0x70] sm:$0xff] 0.0
          %279 = vst [vmem:[#allocation2 + $0x78] sm:$0xff] 0.0
        $region44: #{tpu_custom_call.1} parent=31 // pred_fallthru
          _
        %v280 = vld [vmem:[#allocation2] sm:$0xff]
        %v281 = vld [vmem:[#allocation2 + $0x8] sm:$0xff]
        %v282 = vld [vmem:[#allocation2 + $0x10] sm:$0xff]
        %v283 = vld [vmem:[#allocation2 + $0x18] sm:$0xff]
        %v284 = vld [vmem:[#allocation2 + $0x20] sm:$0xff]
        %v285 = vld [vmem:[#allocation2 + $0x28] sm:$0xff]
        %v286 = vld [vmem:[#allocation2 + $0x30] sm:$0xff]
        %v287 = vld [vmem:[#allocation2 + $0x38] sm:$0xff]
        %v288 = vld [vmem:[#allocation2 + $0x40] sm:$0xff]
        %v289 = vld [vmem:[#allocation2 + $0x48] sm:$0xff]
        %v290 = vld [vmem:[#allocation2 + $0x50] sm:$0xff]
        %v291 = vld [vmem:[#allocation2 + $0x58] sm:$0xff]
        %v292 = vld [vmem:[#allocation2 + $0x60] sm:$0xff]
        %v293 = vld [vmem:[#allocation2 + $0x68] sm:$0xff]
        %v294 = vld [vmem:[#allocation2 + $0x70] sm:$0xff]
        %v295 = vld [vmem:[#allocation2 + $0x78] sm:$0xff]
        %v296 = vld [vmem:[#allocation3] sm:$0xff]
        %v297 = vld [vmem:[#allocation3 + $0x8] sm:$0xff]
        %v298 = vld [vmem:[#allocation3 + $0x10] sm:$0xff]
        %v299 = vld [vmem:[#allocation3 + $0x18] sm:$0xff]
        %v300 = vld [vmem:[#allocation3 + $0x20] sm:$0xff]
        %v301 = vld [vmem:[#allocation3 + $0x28] sm:$0xff]
        %v302 = vld [vmem:[#allocation3 + $0x30] sm:$0xff]
        %v303 = vld [vmem:[#allocation3 + $0x38] sm:$0xff]
        %v304 = vld [vmem:[#allocation3 + $0x40] sm:$0xff]
        %v305 = vld [vmem:[#allocation3 + $0x48] sm:$0xff]
        %v306 = vld [vmem:[#allocation3 + $0x50] sm:$0xff]
        %v307 = vld [vmem:[#allocation3 + $0x58] sm:$0xff]
        %v308 = vld [vmem:[#allocation3 + $0x60] sm:$0xff]
        %v309 = vld [vmem:[#allocation3 + $0x68] sm:$0xff]
        %v310 = vld [vmem:[#allocation3 + $0x70] sm:$0xff]
        %v311 = vld [vmem:[#allocation3 + $0x78] sm:$0xff]
        %v312 = vld [vmem:[#allocation3 + $0x80] sm:$0xff]
        %v313 = vld [vmem:[#allocation3 + $0x88] sm:$0xff]
        %v314 = vld [vmem:[#allocation3 + $0x90] sm:$0xff]
        %v315 = vld [vmem:[#allocation3 + $0x98] sm:$0xff]
        %v316 = vld [vmem:[#allocation3 + $0xa0] sm:$0xff]
        %v317 = vld [vmem:[#allocation3 + $0xa8] sm:$0xff]
        %v318 = vld [vmem:[#allocation3 + $0xb0] sm:$0xff]
        %v319 = vld [vmem:[#allocation3 + $0xb8] sm:$0xff]
        %v320 = vld [vmem:[#allocation3 + $0xc0] sm:$0xff]
        %v321 = vld [vmem:[#allocation3 + $0xc8] sm:$0xff]
        %v322 = vld [vmem:[#allocation3 + $0xd0] sm:$0xff]
        %v323 = vld [vmem:[#allocation3 + $0xd8] sm:$0xff]
        %v324 = vld [vmem:[#allocation3 + $0xe0] sm:$0xff]
        %v325 = vld [vmem:[#allocation3 + $0xe8] sm:$0xff]
        %v326 = vld [vmem:[#allocation3 + $0xf0] sm:$0xff]
        %v327 = vld [vmem:[#allocation3 + $0xf8] sm:$0xff]
        %v328 = vld [vmem:[%s227] sm:$0xff]
        %v329 = vld [vmem:[%s227 + $0x8] sm:$0xff]
        %v330 = vld [vmem:[%s227 + $0x10] sm:$0xff]
        %v331 = vld [vmem:[%s227 + $0x18] sm:$0xff]
        %v332 = vld [vmem:[%s227 + $0x20] sm:$0xff]
        %v333 = vld [vmem:[%s227 + $0x28] sm:$0xff]
        %v334 = vld [vmem:[%s227 + $0x30] sm:$0xff]
        %v335 = vld [vmem:[%s227 + $0x38] sm:$0xff]
        %v336 = vld [vmem:[%s227 + $0x40] sm:$0xff]
        %v337 = vld [vmem:[%s227 + $0x48] sm:$0xff]
        %v338 = vld [vmem:[%s227 + $0x50] sm:$0xff]
        %v339 = vld [vmem:[%s227 + $0x58] sm:$0xff]
        %v340 = vld [vmem:[%s227 + $0x60] sm:$0xff]
        %v341 = vld [vmem:[%s227 + $0x68] sm:$0xff]
        %v342 = vld [vmem:[%s227 + $0x70] sm:$0xff]
        %v343 = vld [vmem:[%s227 + $0x78] sm:$0xff]
        %v344 = vld [vmem:[%s227 + $0x80] sm:$0xff]
        %v345 = vld [vmem:[%s227 + $0x88] sm:$0xff]
        %v346 = vld [vmem:[%s227 + $0x90] sm:$0xff]
        %v347 = vld [vmem:[%s227 + $0x98] sm:$0xff]
        %v348 = vld [vmem:[%s227 + $0xa0] sm:$0xff]
        %v349 = vld [vmem:[%s227 + $0xa8] sm:$0xff]
        %v350 = vld [vmem:[%s227 + $0xb0] sm:$0xff]
        %v351 = vld [vmem:[%s227 + $0xb8] sm:$0xff]
        %v352 = vld [vmem:[%s227 + $0xc0] sm:$0xff]
        %v353 = vld [vmem:[%s227 + $0xc8] sm:$0xff]
        %v354 = vld [vmem:[%s227 + $0xd0] sm:$0xff]
        %v355 = vld [vmem:[%s227 + $0xd8] sm:$0xff]
        %v356 = vld [vmem:[%s227 + $0xe0] sm:$0xff]
        %v357 = vld [vmem:[%s227 + $0xe8] sm:$0xff]
        %v358 = vld [vmem:[%s227 + $0xf0] sm:$0xff]
        %v359 = vld [vmem:[%s227 + $0xf8] sm:$0xff]
        %360 = vmatprep.subr.mxu0 0.0
        %361 = vmatpush1.msra.mxu0 %v343
        %362 = vmatprep.subr.mxu0 0.0
        %363 = vmatpush1.msra.mxu0 %v342
        %364 = vmatprep.subr.mxu0 0.0
        %365 = vmatpush1.msra.mxu0 %v341
        %366 = vmatprep.subr.mxu0 0.0
        %367 = vmatpush1.msra.mxu0 %v340
        %368 = vmatprep.subr.mxu0 0.0
        %369 = vmatpush1.msra.mxu0 %v339
        %370 = vmatprep.subr.mxu0 0.0
        %371 = vmatpush1.msra.mxu0 %v338
        %372 = vmatprep.subr.mxu0 0.0
        %373 = vmatpush1.msra.mxu0 %v337
        %374 = vmatprep.subr.mxu0 0.0
        %375 = vmatpush1.msra.mxu0 %v336
        %376 = vmatprep.subr.mxu0 0.0
        %377 = vmatpush1.msra.mxu0 %v335
        %378 = vmatprep.subr.mxu0 0.0
        %379 = vmatpush1.msra.mxu0 %v334
        %380 = vmatprep.subr.mxu0 0.0
        %381 = vmatpush1.msra.mxu0 %v333
        %382 = vmatprep.subr.mxu0 0.0
        %383 = vmatpush1.msra.mxu0 %v332
        %384 = vmatprep.subr.mxu0 0.0
        %385 = vmatpush1.msra.mxu0 %v331
        %386 = vmatprep.subr.mxu0 0.0
        %387 = vmatpush1.msra.mxu0 %v330
        %388 = vmatprep.subr.mxu0 0.0
        %389 = vmatpush1.msra.mxu0 %v329
        %390 = vmatprep.subr.mxu0 0.0
        %391 = vmatpush1.msra.mxu0 %v328
        %392 = vmatprep.subr.mxu0 0.0
        %393 = vmatpush2.msra.mxu0 %v359
        %394 = vmatprep.subr.mxu0 0.0
        %395 = vmatpush2.msra.mxu0 %v358
        %396 = vmatprep.subr.mxu0 0.0
        %397 = vmatpush2.msra.mxu0 %v357
        %398 = vmatprep.subr.mxu0 0.0
        %399 = vmatpush2.msra.mxu0 %v356
        %400 = vmatprep.subr.mxu0 0.0
        %401 = vmatpush2.msra.mxu0 %v355
        %402 = vmatprep.subr.mxu0 0.0
        %403 = vmatpush2.msra.mxu0 %v354
        %404 = vmatprep.subr.mxu0 0.0
        %405 = vmatpush2.msra.mxu0 %v353
        %406 = vmatprep.subr.mxu0 0.0
        %407 = vmatpush2.msra.mxu0 %v352
        %408 = vmatprep.subr.mxu0 0.0
        %409 = vmatpush2.msra.mxu0 %v351
        %410 = vmatprep.subr.mxu0 0.0
        %411 = vmatpush2.msra.mxu0 %v350
        %412 = vmatprep.subr.mxu0 0.0
        %413 = vmatpush2.msra.mxu0 %v349
        %414 = vmatprep.subr.mxu0 0.0
        %415 = vmatpush2.msra.mxu0 %v348
        %416 = vmatprep.subr.mxu0 0.0
        %417 = vmatpush2.msra.mxu0 %v347
        %418 = vmatprep.subr.mxu0 0.0
        %419 = vmatpush2.msra.mxu0 %v346
        %420 = vmatprep.subr.mxu0 0.0
        %421 = vmatpush2.msra.mxu0 %v345
        %422 = vmatprep.subr.mxu0 0.0
        %423 = vmatpush2.msra.mxu0 %v344
        %424 = vmatprep.mubr.f32.mxu0 %v297
        %425 = vmatmul.mubr.f32.gmra.mxu0 %v296
        %v426 = vpop.f32.mrf.mxu0
        %v427 = vadd.f32 0.0, %v426
        %v428 = vpop.f32.mrf.mxu0
        %429 = vmatprep.mubr.f32.mxu0 %v299
        %430 = vmatmul.mubr.f32.gmra.mxu0 %v298
        %v431 = vpop.f32.mrf.mxu0
        %v432 = vadd.f32 0.0, %v431
        %v433 = vpop.f32.mrf.mxu0
        %434 = vmatprep.mubr.f32.mxu0 %v301
        %435 = vmatmul.mubr.f32.gmra.mxu0 %v300
        %v436 = vpop.f32.mrf.mxu0
        %v437 = vadd.f32 0.0, %v436
        %v438 = vpop.f32.mrf.mxu0
        %439 = vmatprep.mubr.f32.mxu0 %v303
        %440 = vmatmul.mubr.f32.gmra.mxu0 %v302
        %v441 = vpop.f32.mrf.mxu0
        %v442 = vadd.f32 0.0, %v441
        %v443 = vpop.f32.mrf.mxu0
        %444 = vmatprep.mubr.f32.mxu0 %v305
        %445 = vmatmul.mubr.f32.gmra.mxu0 %v304
        %v446 = vpop.f32.mrf.mxu0
        %v447 = vadd.f32 0.0, %v446
        %v448 = vpop.f32.mrf.mxu0
        %449 = vmatprep.mubr.f32.mxu0 %v307
        %450 = vmatmul.mubr.f32.gmra.mxu0 %v306
        %v451 = vpop.f32.mrf.mxu0
        %v452 = vadd.f32 0.0, %v451
        %v453 = vpop.f32.mrf.mxu0
        %454 = vmatprep.mubr.f32.mxu0 %v309
        %455 = vmatmul.mubr.f32.gmra.mxu0 %v308
        %v456 = vpop.f32.mrf.mxu0
        %v457 = vadd.f32 0.0, %v456
        %v458 = vpop.f32.mrf.mxu0
        %459 = vmatprep.mubr.f32.mxu0 %v311
        %460 = vmatmul.mubr.f32.gmra.mxu0 %v310
        %v461 = vpop.f32.mrf.mxu0
        %v462 = vadd.f32 0.0, %v461
        %v463 = vpop.f32.mrf.mxu0
        %464 = vmatprep.mubr.f32.mxu0 %v313
        %465 = vmatmul.mubr.f32.gmra.mxu0 %v312
        %v466 = vpop.f32.mrf.mxu0
        %v467 = vadd.f32 0.0, %v466
        %v468 = vpop.f32.mrf.mxu0
        %469 = vmatprep.mubr.f32.mxu0 %v315
        %470 = vmatmul.mubr.f32.gmra.mxu0 %v314
        %v471 = vpop.f32.mrf.mxu0
        %v472 = vadd.f32 0.0, %v471
        %v473 = vpop.f32.mrf.mxu0
        %474 = vmatprep.mubr.f32.mxu0 %v317
        %475 = vmatmul.mubr.f32.gmra.mxu0 %v316
        %v476 = vpop.f32.mrf.mxu0
        %v477 = vadd.f32 0.0, %v476
        %v478 = vpop.f32.mrf.mxu0
        %479 = vmatprep.mubr.f32.mxu0 %v319
        %480 = vmatmul.mubr.f32.gmra.mxu0 %v318
        %v481 = vpop.f32.mrf.mxu0
        %v482 = vadd.f32 0.0, %v481
        %v483 = vpop.f32.mrf.mxu0
        %484 = vmatprep.mubr.f32.mxu0 %v321
        %485 = vmatmul.mubr.f32.gmra.mxu0 %v320
        %v486 = vpop.f32.mrf.mxu0
        %v487 = vadd.f32 0.0, %v486
        %v488 = vpop.f32.mrf.mxu0
        %489 = vmatprep.mubr.f32.mxu0 %v323
        %490 = vmatmul.mubr.f32.gmra.mxu0 %v322
        %v491 = vpop.f32.mrf.mxu0
        %v492 = vadd.f32 0.0, %v491
        %v493 = vpop.f32.mrf.mxu0
        %494 = vmatprep.mubr.f32.mxu0 %v325
        %495 = vmatmul.mubr.f32.gmra.mxu0 %v324
        %v496 = vpop.f32.mrf.mxu0
        %v497 = vadd.f32 0.0, %v496
        %v498 = vpop.f32.mrf.mxu0
        %499 = vmatprep.mubr.f32.mxu0 %v327
        %500 = vmatmul.mubr.f32.gmra.mxu0 %v326
        %v501 = vpop.f32.mrf.mxu0
        %v502 = vadd.f32 0.0, %v501
        %v503 = vpop.f32.mrf.mxu0
        %504 = vdwg.mxu0
        %v505 = vadd.f32 %v280, %v427
        %v506 = vadd.f32 %v281, %v432
        %v507 = vadd.f32 %v282, %v437
        %v508 = vadd.f32 %v283, %v442
        %v509 = vadd.f32 %v284, %v447
        %v510 = vadd.f32 %v285, %v452
        %v511 = vadd.f32 %v286, %v457
        %v512 = vadd.f32 %v287, %v462
        %v513 = vadd.f32 %v288, %v467
        %v514 = vadd.f32 %v289, %v472
        %v515 = vadd.f32 %v290, %v477
        %v516 = vadd.f32 %v291, %v482
        %v517 = vadd.f32 %v292, %v487
        %v518 = vadd.f32 %v293, %v492
        %v519 = vadd.f32 %v294, %v497
        %v520 = vadd.f32 %v295, %v502
        %521 = vst [vmem:[#allocation2] sm:$0xff] %v505
        %522 = vst [vmem:[#allocation2 + $0x8] sm:$0xff] %v506
        %523 = vst [vmem:[#allocation2 + $0x10] sm:$0xff] %v507
        %524 = vst [vmem:[#allocation2 + $0x18] sm:$0xff] %v508
        %525 = vst [vmem:[#allocation2 + $0x20] sm:$0xff] %v509
        %526 = vst [vmem:[#allocation2 + $0x28] sm:$0xff] %v510
        %527 = vst [vmem:[#allocation2 + $0x30] sm:$0xff] %v511
        %528 = vst [vmem:[#allocation2 + $0x38] sm:$0xff] %v512
        %529 = vst [vmem:[#allocation2 + $0x40] sm:$0xff] %v513
        %530 = vst [vmem:[#allocation2 + $0x48] sm:$0xff] %v514
        %531 = vst [vmem:[#allocation2 + $0x50] sm:$0xff] %v515
        %532 = vst [vmem:[#allocation2 + $0x58] sm:$0xff] %v516
        %533 = vst [vmem:[#allocation2 + $0x60] sm:$0xff] %v517
        %534 = vst [vmem:[#allocation2 + $0x68] sm:$0xff] %v518
        %535 = vst [vmem:[#allocation2 + $0x70] sm:$0xff] %v519
        %536 = vst [vmem:[#allocation2 + $0x78] sm:$0xff] %v520
        // Predicated region
        $region45: #{tpu_custom_call.1} parent=31 // pred_check
          %p537 = pneg %p260
        $region46: #{tpu_custom_call.1} parent=31 // pred_check_branch
          %539 = sbr.rel (%p537) target = $region48
        $region47: #{tpu_custom_call.1} parent=31 // pred_region
          %v540 = vld [vmem:[#allocation2] sm:$0xff]
          %v541 = vld [vmem:[#allocation2 + $0x8] sm:$0xff]
          %v542 = vld [vmem:[#allocation2 + $0x10] sm:$0xff]
          %v543 = vld [vmem:[#allocation2 + $0x18] sm:$0xff]
          %v544 = vld [vmem:[#allocation2 + $0x20] sm:$0xff]
          %v545 = vld [vmem:[#allocation2 + $0x28] sm:$0xff]
          %v546 = vld [vmem:[#allocation2 + $0x30] sm:$0xff]
          %v547 = vld [vmem:[#allocation2 + $0x38] sm:$0xff]
          %v548 = vld [vmem:[#allocation2 + $0x40] sm:$0xff]
          %v549 = vld [vmem:[#allocation2 + $0x48] sm:$0xff]
          %v550 = vld [vmem:[#allocation2 + $0x50] sm:$0xff]
          %v551 = vld [vmem:[#allocation2 + $0x58] sm:$0xff]
          %v552 = vld [vmem:[#allocation2 + $0x60] sm:$0xff]
          %v553 = vld [vmem:[#allocation2 + $0x68] sm:$0xff]
          %v554 = vld [vmem:[#allocation2 + $0x70] sm:$0xff]
          %v555 = vld [vmem:[#allocation2 + $0x78] sm:$0xff]
          %v556 = vld [vmem:[%s258] sm:$0x1]
          %v558 = vlaneseq
          %v559 = vshrl.u32 %v558, 7
          %v560 = vsub.s32 0, %v559
          %v561 = vrot.slane %v556, %v560
          %v563 = vadd.f32 %v540, %v561
          %v564 = vadd.f32 %v541, %v561
          %v565 = vadd.f32 %v542, %v561
          %v566 = vadd.f32 %v543, %v561
          %v567 = vadd.f32 %v544, %v561
          %v568 = vadd.f32 %v545, %v561
          %v569 = vadd.f32 %v546, %v561
          %v570 = vadd.f32 %v547, %v561
          %v571 = vadd.f32 %v548, %v561
          %v572 = vadd.f32 %v549, %v561
          %v573 = vadd.f32 %v550, %v561
          %v574 = vadd.f32 %v551, %v561
          %v575 = vadd.f32 %v552, %v561
          %v576 = vadd.f32 %v553, %v561
          %v577 = vadd.f32 %v554, %v561
          %v578 = vadd.f32 %v555, %v561
          %579 = vst [vmem:[%s252] sm:$0xff] %v563
          %580 = vst [vmem:[%s252 + $0x8] sm:$0xff] %v564
          %581 = vst [vmem:[%s252 + $0x10] sm:$0xff] %v565
          %582 = vst [vmem:[%s252 + $0x18] sm:$0xff] %v566
          %583 = vst [vmem:[%s252 + $0x20] sm:$0xff] %v567
          %584 = vst [vmem:[%s252 + $0x28] sm:$0xff] %v568
          %585 = vst [vmem:[%s252 + $0x30] sm:$0xff] %v569
          %586 = vst [vmem:[%s252 + $0x38] sm:$0xff] %v570
          %587 = vst [vmem:[%s252 + $0x40] sm:$0xff] %v571
          %588 = vst [vmem:[%s252 + $0x48] sm:$0xff] %v572
          %589 = vst [vmem:[%s252 + $0x50] sm:$0xff] %v573
          %590 = vst [vmem:[%s252 + $0x58] sm:$0xff] %v574
          %591 = vst [vmem:[%s252 + $0x60] sm:$0xff] %v575
          %592 = vst [vmem:[%s252 + $0x68] sm:$0xff] %v576
          %593 = vst [vmem:[%s252 + $0x70] sm:$0xff] %v577
          %594 = vst [vmem:[%s252 + $0x78] sm:$0xff] %v578
        $region48: #{tpu_custom_call.1} parent=31 // pred_fallthru
          _
        %s595 = sand.u32 %s132, 1
        %s596 = scalar_lea.sflag [#allocation5], %s595
        %s597 = sand.u32 %s132, 1
        %s598 = smul.addr %s597, 128
        %s599 = scalar_lea.vmem [#allocation8], %s598
        // Predicated region
        $region49: #{tpu_custom_call.1} parent=31 // pred_check
          %p600 = pneg %p142
        $region50: #{tpu_custom_call.1} parent=31 // pred_check_branch
          %602 = sbr.rel (%p600) target = $region52
        $region51: #{tpu_custom_call.1} parent=31 // pred_region
          %s603 = smul.u32 16, %s26
          %s605 = ssub.s32 2048, 2048
          %606 = vsyncadd %s596, %s605
          %s607 = smul.addr %s603, 2
          %s608 = sadd.s32 %s27, %s607
          %s609 = smul.addr %s608, 128
          %s610 = scalar_lea.hbm %s3, %s609
          %s611 = sshll.u32 %s599, 4
          %s612 = int_to_ptr.vmem [resolvable:$true] %s611
          %617 = dma.vmem_to_hbm [thread:$0]  %s612, 2048, %s610, %s596, 128, 256, 8
        $region52: #{tpu_custom_call.1} parent=31 // pred_fallthru
          _
      $region32: #{tpu_custom_call.1} parent=5 // pred_fallthru
        _
      %p618 = scmp.le.s32.totalorder 2, %s16
      // Predicated region
      $region53: #{tpu_custom_call.1} parent=5 // pred_check
        %p619 = pneg %p618
      $region54: #{tpu_custom_call.1} parent=5 // pred_check_branch
        %621 = sbr.rel (%p619) target = $region56
      $region55: #{tpu_custom_call.1} parent=5 // pred_region
        %s622 = ssub.s32 %s16, 2
        // Predicated region
        $region57: #{tpu_custom_call.1} parent=55 // pred_check
          %p623 = pneg %p148
        $region58: #{tpu_custom_call.1} parent=55 // pred_check_branch
          %625 = sbr.rel (%p623) target = $region60
        $region59: #{tpu_custom_call.1} parent=55 // pred_region
          %s626 = sand.u32 %s133, 1
          %s627 = scalar_lea.sflag [#allocation5], %s626
          %s628 = sand.u32 %s133, 1
          %s629 = smul.addr %s628, 128
          %s630 = scalar_lea.vmem [#allocation8], %s629
          %631 = dma.done %s627, 2048
        $region60: #{tpu_custom_call.1} parent=55 // pred_fallthru
          _
      $region56: #{tpu_custom_call.1} parent=5 // pred_fallthru
        _
    $region6: #{tpu_custom_call.1} parent=1 // loop_footer
      %s20 = sadd.s32 1, %s16
    $region7: #{tpu_custom_call.1} parent=1 // loop_footer_branch
      %15 = sbr.rel target = $region3
    $region8: #{tpu_custom_call.1} parent=1 // loop_exit
      _
    %632 = vsyncpa [#allocation4], 1
    %s633 = scalar_lea.sflag [#allocation4], 1
    %634 = vsyncpa %s633, 1
    %635 = vsyncpa [#allocation7], 1
    %s636 = scalar_lea.sflag [#allocation7], 1
    %637 = vsyncpa %s636, 1
    %638 = vsyncpa [#allocation5], 1
    %s639 = scalar_lea.sflag [#allocation5], 1
    %640 = vsyncpa %s639, 1

</llo_original>
